<compile_context>
chip_gen: v6e
topology: v6e:2x2x1
jax: 0.10.0
libtpu: 0.0.40
codegen_flags: <defaults>
</compile_context>

<pallas_src>
import functools

import jax
import jax.numpy as jnp
from jax.experimental import pallas as pl
from jax.experimental.pallas import tpu as pltpu


# ---------------------------------------------------------------------------
# pe table (glue, mirrors the PyTorch __init__ buffer exactly)
# ---------------------------------------------------------------------------
def make_pe_table(d_model: int, max_len: int = 5000) -> jnp.ndarray:
    position = jnp.arange(0, max_len, dtype=jnp.float32)[:, None]          # (max_len, 1)
    div_term = jnp.exp(
        jnp.arange(0, d_model, 2, dtype=jnp.float32)
        * (-jnp.log(jnp.float32(10000.0)) / d_model)
    )                                                                       # (d_model//2,)
    pe = jnp.zeros((max_len, d_model), dtype=jnp.float32)
    pe = pe.at[:, 0::2].set(jnp.sin(position * div_term))
    pe = pe.at[:, 1::2].set(jnp.cos(position * div_term))
    return pe                                                               # (max_len, d_model)


# ---------------------------------------------------------------------------
# Layout / tiling helpers
# ---------------------------------------------------------------------------
_BLOCK_BUDGET_ELEMS = 1024 * 1024        # ~4 MiB per f32 x block


def _choose_fold(L: int) -> int:
    """Fold the per-batch flat length L into (s0, L // s0) with s0 on sublanes."""
    for s0 in (32, 16, 8):               # 32 keeps int8 masks & all dtypes un-padded
        if s0 <= L and L % s0 == 0:
            return s0
    return 1                             # rare: S*D not divisible by 8


def _choose_tiles(B: int, s0: int, C: int):
    budget = _BLOCK_BUDGET_ELEMS
    # Lane tile: multiple of 128 (ragged last block is fine), or full C when small.
    if C <= 128:
        tc = C
    else:
        max_tc = max(((budget // s0) // 128) * 128, 128)
        tc = min(C if C % 128 == 0 else pl.cdiv(C, 128) * 128, max_tc)
    nc = pl.cdiv(C, tc)
    # Batch tile from the remaining budget (keeps large B out of VMEM trouble).
    tb = max(1, min(B, budget // (s0 * tc)))
    nb = pl.cdiv(B, tb)
    # Give a v7x megacore at least two grid steps when the work is splittable.
    if nb * nc < 2:
        if B >= 2:
            tb = pl.cdiv(B, 2)
            nb = pl.cdiv(B, tb)
        elif C >= 256:
            tc = max(128, ((tc // 2) // 128) * 128)
            nc = pl.cdiv(C, tc)
    return tb, tc, nb, nc


# ---------------------------------------------------------------------------
# Pallas kernels
# ---------------------------------------------------------------------------
def _pe_add_kernel(x_ref, pe_ref, o_ref):
    # x_ref: (tb, s0, tc), pe_ref: (1, s0, tc) -> broadcast over the batch tile
    o_ref[...] = (x_ref[...] + pe_ref[...]).astype(o_ref.dtype)


def _pe_add_dropout_kernel(x_ref, pe_ref, keep_ref, o_ref, *, scale: float):
    # training-mode inverted dropout applied after the positional add
    y = x_ref[...] + pe_ref[...]
    keep = keep_ref[...] != 0
    o_ref[...] = jnp.where(keep, y * scale, jnp.zeros_like(y)).astype(o_ref.dtype)


# ---------------------------------------------------------------------------
# Wrapper
# ---------------------------------------------------------------------------
def positional_encoding(x, pe_table, *, dropout_p: float = 0.1,
                        training: bool = False, seed: int = 0):
    """x: (B, S, D). pe_table: (max_len, D). Returns (B, S, D)."""
    B, S, D = x.shape
    assert pe_table.shape[0] >= S and pe_table.shape[1] == D
    L = S * D
    itemsize = jnp.dtype(x.dtype).itemsize

    s0 = _choose_fold(L)
    C = L // s0

    # Contiguous (free) reshapes: per-batch flatten then fold onto sublanes.
    x3 = x.reshape(B, s0, C)
    pe3 = pe_table[:S, :].astype(x.dtype).reshape(1, s0, C)

    tb, tc, nb, nc = _choose_tiles(B, s0, C)
    grid = (nc, nb)                      # pe (depends only on c) stays resident over b

    x_spec = pl.BlockSpec((tb, s0, tc), lambda c, b: (b, 0, c))
    pe_spec = pl.BlockSpec((1, s0, tc), lambda c, b: (0, 0, c))
    out_spec = pl.BlockSpec((tb, s0, tc), lambda c, b: (b, 0, c))
    out_shape = jax.ShapeDtypeStruct((B, s0, C), x.dtype)

    use_dropout = training and dropout_p > 0.0

    # Scoped-VMEM request: double-buffered x + out + pe (+ uint8 mask) with headroom.
    block_bytes = tb * s0 * tc * itemsize
    resident = 2 * (2 * block_bytes + s0 * tc * itemsize
                    + (tb * s0 * tc if use_dropout else 0))
    vmem_limit = min(max(int(resident * 1.5) + (4 << 20), 16 << 20), 64 << 20)
    cparams = pltpu.CompilerParams(
        dimension_semantics=("parallel", "parallel"),
        vmem_limit_bytes=vmem_limit,
    )

    if not use_dropout:
        # eval mode: dropout is identity (PyTorch nn.Dropout in .eval())
        out3 = pl.pallas_call(
            _pe_add_kernel,
            out_shape=out_shape,
            grid=grid,
            in_specs=[x_spec, pe_spec],
            out_specs=out_spec,
            compiler_params=cparams,
        )(x3, pe3)
        return out3.reshape(B, S, D)

    if dropout_p >= 1.0:
        # p == 1 drops everything (avoids divide-by-zero in the scale)
        return jnp.zeros_like(x)

    # training mode: stochastic inverted dropout with a host-generated keep mask
    # (same distribution / scaling as torch, different RNG bits).
    keep = jax.random.bernoulli(
        jax.random.PRNGKey(seed), 1.0 - float(dropout_p), (B, s0, C)
    ).astype(jnp.uint8)

    kernel = functools.partial(_pe_add_dropout_kernel,
                               scale=1.0 / (1.0 - float(dropout_p)))
    out3 = pl.pallas_call(
        kernel,
        out_shape=out_shape,
        grid=grid,
        in_specs=[x_spec, pe_spec, x_spec],   # mask: same blocks / index map as x
        out_specs=out_spec,
        compiler_params=cparams,
    )(x3, pe3, keep)
    return out3.reshape(B, S, D)


# ---------------------------------------------------------------------------
# Main
# ---------------------------------------------------------------------------
if __name__ == "__main__":
    B, S, D = 2, 8, 32          # batch, seq_len, d_model
    MAX_LEN = 128               # small max_len (>= S) for the demo table

    key = jax.random.PRNGKey(0)
    x = jax.random.normal(key, (B, S, D), dtype=jnp.float32)
    pe_table = make_pe_table(D, MAX_LEN)

    # eval-mode forward (dropout = identity)
    out = positional_encoding(x, pe_table, dropout_p=0.1, training=False)
    out = jax.block_until_ready(out)
    ref = x + pe_table[None, :S, :]
    assert out.shape == (B, S, D)
    assert jnp.allclose(out, ref, atol=1e-6), "eval-mode mismatch vs reference"

    # training-mode forward: every element must be either 0 (dropped) or the
    # inverted-dropout-scaled value (kept), and a plausible fraction is dropped.
    p = 0.1
    out_tr = positional_encoding(x, pe_table, dropout_p=p, training=True, seed=42)
    out_tr = jax.block_until_ready(out_tr)
    scaled = ref / (1.0 - p)
    is_zero = jnp.isclose(out_tr, 0.0, atol=1e-6)
    is_kept = jnp.isclose(out_tr, scaled, rtol=1e-5, atol=1e-5)
    assert out_tr.shape == (B, S, D)
    assert bool(jnp.all(is_zero | is_kept)), "training-mode dropout output invalid"
    dropped_frac = float(jnp.mean((is_zero & (~is_kept)).astype(jnp.float32)))
    assert 0.0 < dropped_frac < 0.3, "dropout drop fraction implausible"

    print("KERNEL_OK")
</pallas_src>

<mosaic_0001>
module attributes {stable_mosaic.version = 11 : i64} {
  func.func @_pe_add_kernel(%arg0: i32, %arg1: i32, %arg2: memref<1x32x8xf32, #tpu.memory_space<vmem>>, %arg3: memref<1x32x8xf32, #tpu.memory_space<vmem>>, %arg4: memref<1x32x8xf32, #tpu.memory_space<vmem>>) attributes {dimension_semantics = [#tpu.dimension_semantics<parallel>, #tpu.dimension_semantics<parallel>], iteration_bounds = array<i64: 1, 2>, scalar_prefetch = 0 : i64, scratch_operands = 0 : i64, tpu.core_type = #tpu.core_type<tc>, window_params = [{transform_indices = @transform_0, window_bounds = array<i64: 1, 32, 8>}, {transform_indices = @transform_1, window_bounds = array<i64: 1, 32, 8>}, {transform_indices = @transform_2, window_bounds = array<i64: 1, 32, 8>}]} {
    %c0 = arith.constant 0 : index
    %c0_0 = arith.constant 0 : index
    %c0_1 = arith.constant 0 : index
    %0 = vector.load %arg2[%c0, %c0_0, %c0_1] : memref<1x32x8xf32, #tpu.memory_space<vmem>>, vector<1x32x8xf32>
    %c0_2 = arith.constant 0 : index
    %c0_3 = arith.constant 0 : index
    %c0_4 = arith.constant 0 : index
    %1 = vector.load %arg3[%c0_2, %c0_3, %c0_4] : memref<1x32x8xf32, #tpu.memory_space<vmem>>, vector<1x32x8xf32>
    %2 = arith.addf %0, %1 : vector<1x32x8xf32>
    %c0_5 = arith.constant 0 : index
    %c0_6 = arith.constant 0 : index
    %c0_7 = arith.constant 0 : index
    %3 = vector.load %arg4[%c0_5, %c0_6, %c0_7] : memref<1x32x8xf32, #tpu.memory_space<vmem>>, vector<1x32x8xf32>
    tpu.vector_store %arg4[%c0_5, %c0_6, %c0_7], %2 {strides = array<i32>} : memref<1x32x8xf32, #tpu.memory_space<vmem>>, vector<1x32x8xf32>,
    return
  }
  func.func @transform_0(%arg0: i32, %arg1: i32) -> (i32, i32, i32) {
    %c0_i32 = arith.constant 0 : i32
    %c0_i32_0 = arith.constant 0 : i32
    return %arg1, %c0_i32, %arg0 : i32, i32, i32
  }
  func.func @transform_1(%arg0: i32, %arg1: i32) -> (i32, i32, i32) {
    %c0_i32 = arith.constant 0 : i32
    %c0_i32_0 = arith.constant 0 : i32
    %c0_i32_1 = arith.constant 0 : i32
    return %c0_i32, %c0_i32_0, %arg0 : i32, i32, i32
  }
  func.func @transform_2(%arg0: i32, %arg1: i32) -> (i32, i32, i32) {
    %c0_i32 = arith.constant 0 : i32
    %c0_i32_0 = arith.constant 0 : i32
    return %arg1, %c0_i32, %arg0 : i32, i32, i32
  }
}

</mosaic_0001>

<llo_original>
// kernel: tpu_custom_call.1
$region0: #{tpu_custom_call.1}
  #allocation0 [shape = 'u32[]', space=smem, size = 0x4, offset = 0x4, fixed_abs, tag = 'smem constant byte address 0x4 - core index']
  #allocation1 [shape = 'u32[144,128]{1,0:T(1,128)}', space=vmem, size = 0x12000, scoped, tag = 'internal scratch']
  %s0 = inlined_call_operand.vmem [shape: f32[2,32,8], index: 0, kind: input, shape index: {}]
  %s1 = inlined_call_operand.vmem [shape: f32[1,32,8], index: 1, kind: input, shape index: {}]
  %s2 = inlined_call_operand.vmem [shape: f32[2,32,8], index: 2, kind: output, shape index: {}]
  %s3 = sld [smem:[#allocation0]]
  $region41: #{tpu_custom_call.1} parent=0
    _
  %s5 = ssub.s32 1, %s3
  %s6 = scalar_select 0, %s5, %s3
  loop: start=0, step=1, limit=4
  $region2: #{tpu_custom_call.1} parent=0 // loop_pre_header
    _
  $region3: #{tpu_custom_call.1} parent=0 // loop_header
    %s8 = sphi 0, %s12
    %p9 = scmp.ge.s32.totalorder %s8, 4
    %s15 = sphi 0, %s27
    %s16 = sphi 0, %s23
    %s17 = sphi 0, %s15
    %s18 = sphi 0, %s16
    %s19 = sphi 0, %s17
    %s20 = sphi 0, %s18
    %s32 = sphi 0, %s34
    %s35 = sphi 0, %s32
    %s36 = sphi 0, %s35
    %s52 = sphi 0, %s36
    %s58 = sphi 0, %s60
    %s61 = sphi 0, %s58
    %s62 = sphi 0, %s61
    %s78 = sphi 0, %s62
    %s86 = sphi 0, %s88
    %s89 = sphi 0, %s86
    %s90 = sphi 0, %s89
    %s106 = sphi 0, %s90
  $region4: #{tpu_custom_call.1} parent=0 // loop_header_branch
    %11 = sbr.rel (%p9) target = $region8
  $region5: #{tpu_custom_call.1} parent=0 // loop_body
    %s13 = ssub.s32 %s8, 1
    %s14 = ssub.s32 %s8, 2
    %s21 = sadd.s32 1, %s16
    %p22 = scmp.ge.s32.totalorder %s21, 2
    %s23 = scalar_select %p22, 0, %s21
    %s24 = sadd.s32 1, %s15
    %s25 = scalar_select %p22, %s24, %s15
    %p26 = scmp.ge.s32.totalorder %s25, 1
    %s27 = scalar_select %p26, 0, %s25
    %s28 = ssub.s32 %s16, %s23
    %s29 = ssub.s32 %s15, %s27
    %s30 = sor.u32 %s28, %s29
    %p31 = scmp.eq.s32.totalorder %s30, 0
    %s33 = sadd.s32 %s32, 1
    %s34 = scalar_select %p31, %s32, %s33
    %p37 = pneg %p31
    %p38 = scmp.eq.s32.totalorder %s8, 1
    %p39 = por %p37, %p38
    %p40 = scmp.ne.s32.totalorder %s32, %s35
    %p41 = scmp.eq.s32.totalorder %s8, 0
    %p42 = por %p40, %p41
    %p43 = scmp.ne.s32.totalorder %s32, %s35
    %p44 = scmp.eq.s32.totalorder %s13, 1
    %p45 = por %p43, %p44
    %p46 = scmp.ne.s32.totalorder %s35, %s36
    %p47 = scmp.eq.s32.totalorder %s13, 0
    %p48 = por %p46, %p47
    %p49 = scmp.ne.s32.totalorder %s35, %s36
    %p50 = scmp.eq.s32.totalorder %s14, 1
    %p51 = por %p49, %p50
    %p53 = scmp.ne.s32.totalorder %s36, %s52
    %p54 = scmp.eq.s32.totalorder %s14, 0
    %p55 = por %p53, %p54
    %s56 = ssub.s32 %s15, %s27
    %p57 = scmp.eq.s32.totalorder %s56, 0
    %s59 = sadd.s32 %s58, 1
    %s60 = scalar_select %p57, %s58, %s59
    %p63 = pneg %p57
    %p64 = scmp.eq.s32.totalorder %s8, 1
    %p65 = por %p63, %p64
    %p66 = scmp.ne.s32.totalorder %s58, %s61
    %p67 = scmp.eq.s32.totalorder %s8, 0
    %p68 = por %p66, %p67
    %p69 = scmp.ne.s32.totalorder %s58, %s61
    %p70 = scmp.eq.s32.totalorder %s13, 1
    %p71 = por %p69, %p70
    %p72 = scmp.ne.s32.totalorder %s61, %s62
    %p73 = scmp.eq.s32.totalorder %s13, 0
    %p74 = por %p72, %p73
    %p75 = scmp.ne.s32.totalorder %s61, %s62
    %p76 = scmp.eq.s32.totalorder %s14, 1
    %p77 = por %p75, %p76
    %p79 = scmp.ne.s32.totalorder %s62, %s78
    %p80 = scmp.eq.s32.totalorder %s14, 0
    %p81 = por %p79, %p80
    %s82 = ssub.s32 %s16, %s23
    %s83 = ssub.s32 %s15, %s27
    %s84 = sor.u32 %s82, %s83
    %p85 = scmp.eq.s32.totalorder %s84, 0
    %s87 = sadd.s32 %s86, 1
    %s88 = scalar_select %p85, %s86, %s87
    %p91 = pneg %p85
    %p92 = scmp.eq.s32.totalorder %s8, 1
    %p93 = por %p91, %p92
    %p94 = scmp.ne.s32.totalorder %s86, %s89
    %p95 = scmp.eq.s32.totalorder %s8, 0
    %p96 = por %p94, %p95
    %p97 = scmp.ne.s32.totalorder %s86, %s89
    %p98 = scmp.eq.s32.totalorder %s13, 1
    %p99 = por %p97, %p98
    %p100 = scmp.ne.s32.totalorder %s89, %s90
    %p101 = scmp.eq.s32.totalorder %s13, 0
    %p102 = por %p100, %p101
    %p103 = scmp.ne.s32.totalorder %s89, %s90
    %p104 = scmp.eq.s32.totalorder %s14, 1
    %p105 = por %p103, %p104
    %p107 = scmp.ne.s32.totalorder %s90, %s106
    %p108 = scmp.eq.s32.totalorder %s14, 0
    %p109 = por %p107, %p108
    %p110 = scmp.le.s32.totalorder 1, %s8
    %p111 = scmp.lt.s32.totalorder %s8, 3
    %p112 = pnand %p110, %p111
    %p113 = pneg %p112
    // Predicated region
    $region9: #{tpu_custom_call.1} parent=5 // pred_check
      _
    $region10: #{tpu_custom_call.1} parent=5 // pred_check_branch
      %115 = sbr.rel (%p112) target = $region12
    $region11: #{tpu_custom_call.1} parent=5 // pred_region
      %s116 = ssub.s32 %s8, 1
      // Predicated region
      $region13: #{tpu_custom_call.1} parent=11 // pred_check
        %p117 = pneg %p74
      $region14: #{tpu_custom_call.1} parent=11 // pred_check_branch
        %119 = sbr.rel (%p117) target = $region16
      $region15: #{tpu_custom_call.1} parent=11 // pred_region
        %p120 = scmp.lt.s32.totalorder %s17, 0
        %s121 = scalar_select %p120, %s17, 0
        %s122 = smul.addr %s121, 8
        %s123 = scalar_lea.vmem %s1, %s122
      $region16: #{tpu_custom_call.1} parent=11 // pred_fallthru
        _
    $region12: #{tpu_custom_call.1} parent=5 // pred_fallthru
      _
    %p124 = scmp.lt.s32.totalorder %s8, 2
    // Predicated region
    $region17: #{tpu_custom_call.1} parent=5 // pred_check
      %p125 = pneg %p124
    $region18: #{tpu_custom_call.1} parent=5 // pred_check_branch
      %127 = sbr.rel (%p125) target = $region20
    $region19: #{tpu_custom_call.1} parent=5 // pred_region
      // Predicated region
      $region21: #{tpu_custom_call.1} parent=19 // pred_check
        %p128 = pneg %p42
      $region22: #{tpu_custom_call.1} parent=19 // pred_check_branch
        %130 = sbr.rel (%p128) target = $region24
      $region23: #{tpu_custom_call.1} parent=19 // pred_region
        %p131 = scmp.lt.s32.totalorder %s16, 1
        %s132 = scalar_select %p131, %s16, 1
        %p133 = scmp.lt.s32.totalorder %s15, 0
        %s134 = scalar_select %p133, %s15, 0
        %s135 = smul.addr %s132, 4
        %s136 = sadd.s32 %s134, %s135
        %s137 = smul.addr %s136, 8
        %s138 = scalar_lea.vmem %s0, %s137
      $region24: #{tpu_custom_call.1} parent=19 // pred_fallthru
        _
    $region20: #{tpu_custom_call.1} parent=5 // pred_fallthru
      _
    %p139 = scmp.le.s32.totalorder 1, %s8
    %p140 = scmp.lt.s32.totalorder %s8, 3
    %p141 = pnand %p139, %p140
    %p142 = pneg %p141
    // Predicated region
    $region25: #{tpu_custom_call.1} parent=5 // pred_check
      _
    $region26: #{tpu_custom_call.1} parent=5 // pred_check_branch
      %144 = sbr.rel (%p141) target = $region28
    $region27: #{tpu_custom_call.1} parent=5 // pred_region
      %s145 = ssub.s32 %s8, 1
      %p146 = scmp.lt.s32.totalorder %s18, 1
      %s147 = scalar_select %p146, %s18, 1
      %p148 = scmp.lt.s32.totalorder %s17, 0
      %s149 = scalar_select %p148, %s17, 0
      %s150 = smul.addr %s147, 4
      %s151 = sadd.s32 %s149, %s150
      %s152 = smul.addr %s151, 8
      %s153 = scalar_lea.vmem %s0, %s152
      %p154 = pneg %p48
      %p155 = pneg %p45
      %p156 = scmp.lt.s32.totalorder %s17, 0
      %s157 = scalar_select %p156, %s17, 0
      %s158 = smul.addr %s157, 8
      %s159 = scalar_lea.vmem %s1, %s158
      %p160 = pneg %p74
      %p161 = pneg %p71
      %p162 = pneg %p102
      %p163 = pneg %p99
      %p164 = scmp.lt.s32.totalorder %s18, 1
      %s165 = scalar_select %p164, %s18, 1
      %p166 = scmp.lt.s32.totalorder %s17, 0
      %s167 = scalar_select %p166, %s17, 0
      %s168 = smul.addr %s165, 4
      %s169 = sadd.s32 %s167, %s168
      %s170 = smul.addr %s169, 8
      %s171 = scalar_lea.vmem %s2, %s170
      %p172 = scmp.lt.s32.totalorder %s18, 1
      %s173 = scalar_select %p172, %s18, 1
      %p174 = scmp.lt.s32.totalorder %s17, 0
      %s175 = scalar_select %p174, %s17, 0
      %s176 = smul.addr %s173, 4
      %s177 = sadd.s32 %s175, %s176
      %s178 = smul.addr %s177, 8
      %s179 = scalar_lea.vmem %s0, %s178
      %p180 = scmp.lt.s32.totalorder %s17, 0
      %s181 = scalar_select %p180, %s17, 0
      %s182 = smul.addr %s181, 8
      %s183 = scalar_lea.vmem %s1, %s182
      %p184 = scmp.lt.s32.totalorder %s18, 1
      %s185 = scalar_select %p184, %s18, 1
      %p186 = scmp.lt.s32.totalorder %s17, 0
      %s187 = scalar_select %p186, %s17, 0
      %s188 = smul.addr %s185, 4
      %s189 = sadd.s32 %s187, %s188
      %s190 = smul.addr %s189, 8
      %s191 = scalar_lea.vmem %s2, %s190
      %v192 = vld [vmem:[%s179] sm:$0xff]
      %v193 = vld [vmem:[%s179 + $0x8] sm:$0xff]
      %v194 = vld [vmem:[%s179 + $0x10] sm:$0xff]
      %v195 = vld [vmem:[%s179 + $0x18] sm:$0xff]
      %v196 = vld [vmem:[%s183] sm:$0xff]
      %v197 = vld [vmem:[%s183 + $0x8] sm:$0xff]
      %v198 = vld [vmem:[%s183 + $0x10] sm:$0xff]
      %v199 = vld [vmem:[%s183 + $0x18] sm:$0xff]
      %v200 = vadd.f32 %v192, %v196
      %v201 = vadd.f32 %v193, %v197
      %v202 = vadd.f32 %v194, %v198
      %v203 = vadd.f32 %v195, %v199
      %vm204 = vcmask 64512
      %205 = vst.msk [vmem:[%s191] sm:$0xff] %vm204, %v200
      %206 = vst.msk [vmem:[%s191 + $0x8] sm:$0xff] %vm204, %v201
      %207 = vst.msk [vmem:[%s191 + $0x10] sm:$0xff] %vm204, %v202
      %208 = vst.msk [vmem:[%s191 + $0x18] sm:$0xff] %vm204, %v203
      %p209 = scmp.lt.s32.totalorder %s18, 1
      %s210 = scalar_select %p209, %s18, 1
      %p211 = scmp.lt.s32.totalorder %s17, 0
      %s212 = scalar_select %p211, %s17, 0
      %s213 = smul.addr %s210, 4
      %s214 = sadd.s32 %s212, %s213
      %s215 = smul.addr %s214, 8
      %s216 = scalar_lea.vmem %s2, %s215
      // Predicated region
      $region29: #{tpu_custom_call.1} parent=27 // pred_check
        %p217 = pneg %p99
      $region30: #{tpu_custom_call.1} parent=27 // pred_check_branch
        %219 = sbr.rel (%p217) target = $region32
      $region31: #{tpu_custom_call.1} parent=27 // pred_region
        _
      $region32: #{tpu_custom_call.1} parent=27 // pred_fallthru
        _
    $region28: #{tpu_custom_call.1} parent=5 // pred_fallthru
      _
    %p220 = scmp.le.s32.totalorder 2, %s8
    // Predicated region
    $region33: #{tpu_custom_call.1} parent=5 // pred_check
      %p221 = pneg %p220
    $region34: #{tpu_custom_call.1} parent=5 // pred_check_branch
      %223 = sbr.rel (%p221) target = $region36
    $region35: #{tpu_custom_call.1} parent=5 // pred_region
      %s224 = ssub.s32 %s8, 2
      // Predicated region
      $region37: #{tpu_custom_call.1} parent=35 // pred_check
        %p225 = pneg %p105
      $region38: #{tpu_custom_call.1} parent=35 // pred_check_branch
        %227 = sbr.rel (%p225) target = $region40
      $region39: #{tpu_custom_call.1} parent=35 // pred_region
        %p228 = scmp.lt.s32.totalorder %s20, 1
        %s229 = scalar_select %p228, %s20, 1
        %p230 = scmp.lt.s32.totalorder %s19, 0
        %s231 = scalar_select %p230, %s19, 0
        %s232 = smul.addr %s229, 4
        %s233 = sadd.s32 %s231, %s232
        %s234 = smul.addr %s233, 8
        %s235 = scalar_lea.vmem %s2, %s234
      $region40: #{tpu_custom_call.1} parent=35 // pred_fallthru
        _
    $region36: #{tpu_custom_call.1} parent=5 // pred_fallthru
      _
  $region6: #{tpu_custom_call.1} parent=0 // loop_footer
    %s12 = sadd.s32 1, %s8
  $region7: #{tpu_custom_call.1} parent=0 // loop_footer_branch
    %7 = sbr.rel target = $region3
  $region8: #{tpu_custom_call.1} parent=0 // loop_exit
    _

</llo_original>
